<compile_context>
chip_gen: v5e
topology: v5e:2x2
jax: 0.10.0
libtpu: 0.0.40
codegen_flags: <defaults>
</compile_context>

<pallas_src>
import functools
import math

import jax
import jax.numpy as jnp
from jax.experimental import pallas as pl
from jax.experimental.pallas import tpu as pltpu


def _threshold_dynamics_kernel(vth_ref, spike_ref, out_ref, *, alpha, beta, incre, adpt_en):
    # Upcast to f32 in vregs (v5e has no bf16 VALU); store back in the output dtype.
    v = vth_ref[...].astype(jnp.float32)
    s = spike_ref[...].astype(jnp.float32)
    if adpt_en:
        # Leaky exponential decay of the adaptive threshold component.
        v = alpha * v + beta
    # Soft update after spike: additive increment gated by spike values.
    out_ref[...] = (v + incre * s).astype(out_ref.dtype)


def _packing_multiple(dtype) -> int:
    # Sublane multiple for dense packed layout: 8 (f32), 16 (bf16), 32 (int8/fp8).
    return max(8, 32 // jnp.dtype(dtype).itemsize)


@functools.partial(
    jax.jit,
    static_argnames=(
        "v_th_alpha", "v_th_beta", "v_th_incre", "v_th_adpt_en", "lane", "tile_rows",
    ),
)
def threshold_dynamics(
    v_th_adpt,
    spike,
    *,
    v_th_alpha,
    v_th_beta,
    v_th_incre,
    v_th_adpt_en=True,
    lane=None,
    tile_rows=1024,
):
    assert v_th_adpt.shape == spike.shape
    orig_shape = v_th_adpt.shape
    out_dtype = v_th_adpt.dtype
    n = math.prod(orig_shape)

    # --- lane width: largest power-of-two multiple of 128 dividing n (no padding
    #     needed in that case); only fall back to padding when n % 128 != 0. ---
    if lane is None:
        lane = 128
        for cand in (1024, 512, 256, 128):
            if n % cand == 0:
                lane = cand
                break
    needs_pad = (n % lane) != 0

    mult = max(_packing_multiple(out_dtype), _packing_multiple(spike.dtype))

    rows = pl.cdiv(n, lane)
    if needs_pad:
        # Rare fallback: pad the flat length up to whole (mult, lane) tiles.
        rows = pl.cdiv(rows, mult) * mult
    n_padded = rows * lane

    # --- block_rows: single full-array block only when tiny; otherwise keep a
    #     multi-step grid (>= ~4 steps) so double-buffering and megacore sharding
    #     stay active; cap at tile_rows (rounded to the packing multiple). ---
    tile_rows_eff = max(mult, pl.cdiv(int(tile_rows), mult) * mult)
    if rows <= mult:
        block_rows = rows  # single block equal to the full array dims
    else:
        block_rows = min(tile_rows_eff, max(mult, pl.cdiv(pl.cdiv(rows, 4), mult) * mult))
    grid = (pl.cdiv(rows, block_rows),)

    v_flat = v_th_adpt.reshape(-1)
    s_flat = spike.reshape(-1)
    if needs_pad:
        pad = n_padded - n
        v_flat = jnp.pad(v_flat, (0, pad))
        s_flat = jnp.pad(s_flat, (0, pad))
    v2d = v_flat.reshape(rows, lane)
    s2d = s_flat.reshape(rows, lane)

    kernel = functools.partial(
        _threshold_dynamics_kernel,
        alpha=float(v_th_alpha),
        beta=float(v_th_beta),
        incre=float(v_th_incre),
        adpt_en=bool(v_th_adpt_en),
    )

    # Double-buffered working set: (v in + out) at state dtype + spike at its dtype.
    state_bytes = jnp.dtype(out_dtype).itemsize
    spike_bytes = jnp.dtype(spike.dtype).itemsize
    per_step_bytes = block_rows * lane * (2 * state_bytes + spike_bytes)
    vmem_limit = min(max(2 * per_step_bytes + (4 << 20), 16 << 20), 48 << 20)

    bytes_accessed = (
        n_padded * state_bytes          # read state
        + n_padded * spike_bytes        # read spike (narrow dtype OK)
        + n_padded * state_bytes        # write updated state
    )

    out2d = pl.pallas_call(
        kernel,
        out_shape=jax.ShapeDtypeStruct((rows, lane), out_dtype),
        grid=grid,
        in_specs=[
            pl.BlockSpec((block_rows, lane), lambda i: (i, 0)),
            pl.BlockSpec((block_rows, lane), lambda i: (i, 0)),
        ],
        out_specs=pl.BlockSpec((block_rows, lane), lambda i: (i, 0)),
        input_output_aliases={0: 0},  # state buffer updated "in place"
        compiler_params=pltpu.CompilerParams(
            dimension_semantics=("parallel",),
            vmem_limit_bytes=int(vmem_limit),
        ),
        cost_estimate=pl.CostEstimate(
            flops=3 * n_padded,
            transcendentals=0,
            bytes_accessed=int(bytes_accessed),
        ),
    )(v2d, s2d)

    if needs_pad:
        return out2d.reshape(-1)[:n].reshape(orig_shape)
    return out2d.reshape(orig_shape)


def _reference(v_th_adpt, spike, alpha, beta, incre, adpt_en):
    v = v_th_adpt.astype(jnp.float32)
    if adpt_en:
        v = alpha * v + beta
    return (v + incre * spike.astype(jnp.float32)).astype(v_th_adpt.dtype)


if __name__ == "__main__":
    # Deterministic "parameters" (scalars from the module's __init__).
    v_th_alpha = 0.9
    v_th_beta = 0.02
    v_th_incre = 0.05
    v_th_adpt_en = True

    key = jax.random.PRNGKey(0)
    k1, k2, k3, k4, k5, k6 = jax.random.split(key, 6)

    run = functools.partial(
        threshold_dynamics,
        v_th_alpha=v_th_alpha,
        v_th_beta=v_th_beta,
        v_th_incre=v_th_incre,
        v_th_adpt_en=v_th_adpt_en,
    )

    # --- Test 1: small NCHW shape; n=2048 -> lane=1024, single full-array block, no pad. ---
    B, C, H, W = 2, 4, 16, 16
    v1 = jax.random.uniform(k1, (B, C, H, W), dtype=jnp.float32)
    s1 = (jax.random.uniform(k2, (B, C, H, W)) > 0.5).astype(jnp.float32)
    out1 = jax.block_until_ready(run(v1, s1))
    ref1 = _reference(v1, s1, v_th_alpha, v_th_beta, v_th_incre, v_th_adpt_en)
    assert out1.shape == v1.shape
    assert jnp.max(jnp.abs(out1 - ref1)) < 1e-6

    # --- Test 2: n=3200 (multiple of 128 only) with a narrow int8 spike -> lane=128,
    #     no padding, spike read at 1 byte/elem. ---
    v2 = jax.random.uniform(k3, (2, 4, 20, 20), dtype=jnp.float32)
    s2 = (jax.random.uniform(k4, (2, 4, 20, 20)) > 0.5).astype(jnp.int8)
    out2 = jax.block_until_ready(run(v2, s2))
    ref2 = _reference(v2, s2, v_th_alpha, v_th_beta, v_th_incre, v_th_adpt_en)
    assert out2.shape == v2.shape
    assert jnp.max(jnp.abs(out2 - ref2)) < 1e-6

    # --- Test 3: n=25600 -> lane=1024, rows=25, multi-step grid (4 steps) with a
    #     partial edge block; exercises masked edge stores + aliasing, no pad. ---
    v3 = jax.random.uniform(k5, (2, 8, 40, 40), dtype=jnp.float32)
    s3 = (jax.random.uniform(k6, (2, 8, 40, 40)) > 0.5).astype(jnp.float32)
    out3 = jax.block_until_ready(run(v3, s3))
    ref3 = _reference(v3, s3, v_th_alpha, v_th_beta, v_th_incre, v_th_adpt_en)
    assert out3.shape == v3.shape
    assert jnp.max(jnp.abs(out3 - ref3)) < 1e-6

    # --- Test 4: ragged numel (1155, not a multiple of 128) -> padding fallback path. ---
    v4 = jax.random.uniform(k1, (3, 5, 7, 11), dtype=jnp.float32)
    s4 = (jax.random.uniform(k2, (3, 5, 7, 11)) > 0.5).astype(jnp.float32)
    out4 = jax.block_until_ready(run(v4, s4))
    ref4 = _reference(v4, s4, v_th_alpha, v_th_beta, v_th_incre, v_th_adpt_en)
    assert out4.shape == v4.shape
    assert jnp.max(jnp.abs(out4 - ref4)) < 1e-6

    print("KERNEL_OK")
</pallas_src>

<mosaic_0001>
module attributes {stable_mosaic.version = 11 : i64} {
  func.func @_threshold_dynamics_kernel(%arg0: i32, %arg1: memref<2x1024xf32, #tpu.memory_space<vmem>>, %arg2: memref<2x1024xf32, #tpu.memory_space<vmem>>, %arg3: memref<2x1024xf32, #tpu.memory_space<vmem>>) attributes {dimension_semantics = [#tpu.dimension_semantics<parallel>], iteration_bounds = array<i64: 1>, scalar_prefetch = 0 : i64, scratch_operands = 0 : i64, tpu.core_type = #tpu.core_type<tc>, window_params = [{transform_indices = @transform_0, window_bounds = array<i64: 2, 1024>}, {transform_indices = @transform_1, window_bounds = array<i64: 2, 1024>}, {transform_indices = @transform_2, window_bounds = array<i64: 2, 1024>}]} {
    %c0 = arith.constant 0 : index
    %c0_0 = arith.constant 0 : index
    %0 = vector.load %arg1[%c0, %c0_0] : memref<2x1024xf32, #tpu.memory_space<vmem>>, vector<2x1024xf32>
    %c0_1 = arith.constant 0 : index
    %c0_2 = arith.constant 0 : index
    %1 = vector.load %arg2[%c0_1, %c0_2] : memref<2x1024xf32, #tpu.memory_space<vmem>>, vector<2x1024xf32>
    %cst = arith.constant 0.899999976 : f32
    %2 = vector.broadcast %cst : f32 to vector<2x1024xf32>
    %3 = arith.mulf %2, %0 : vector<2x1024xf32>
    %cst_3 = arith.constant 2.000000e-02 : f32
    %4 = vector.broadcast %cst_3 : f32 to vector<2x1024xf32>
    %5 = arith.addf %3, %4 : vector<2x1024xf32>
    %cst_4 = arith.constant 5.000000e-02 : f32
    %6 = vector.broadcast %cst_4 : f32 to vector<2x1024xf32>
    %7 = arith.mulf %6, %1 : vector<2x1024xf32>
    %8 = arith.addf %5, %7 : vector<2x1024xf32>
    %c0_5 = arith.constant 0 : index
    %c0_6 = arith.constant 0 : index
    %9 = vector.load %arg3[%c0_5, %c0_6] : memref<2x1024xf32, #tpu.memory_space<vmem>>, vector<2x1024xf32>
    tpu.vector_store %arg3[%c0_5, %c0_6], %8 {strides = array<i32>} : memref<2x1024xf32, #tpu.memory_space<vmem>>, vector<2x1024xf32>,
    return
  }
  func.func @transform_0(%arg0: i32) -> (i32, i32) {
    %c0_i32 = arith.constant 0 : i32
    %c0_i32_0 = arith.constant 0 : i32
    return %arg0, %c0_i32 : i32, i32
  }
  func.func @transform_1(%arg0: i32) -> (i32, i32) {
    %c0_i32 = arith.constant 0 : i32
    %c0_i32_0 = arith.constant 0 : i32
    return %arg0, %c0_i32 : i32, i32
  }
  func.func @transform_2(%arg0: i32) -> (i32, i32) {
    %c0_i32 = arith.constant 0 : i32
    %c0_i32_0 = arith.constant 0 : i32
    return %arg0, %c0_i32 : i32, i32
  }
}

</mosaic_0001>

<llo_original>
// kernel: threshold_dynamics.1
$region0: #{threshold_dynamics.1}
  #allocation0 [shape = 'u32[]', space=smem, size = 0x4, offset = 0x4, fixed_abs, tag = 'smem constant byte address 0x4 - core index']
  #allocation1 [shape = 'u32[72,128]{1,0:T(1,128)}', space=vmem, size = 0x9000, scoped, tag = 'internal scratch']
  %s0 = inlined_call_operand.vmem [shape: f32[2,1024], index: 0, kind: input, shape index: {}, may-alias: {0,2}]
  %s1 = inlined_call_operand.vmem [shape: f32[2,1024], index: 1, kind: input, shape index: {}]
  %s2 = inlined_call_operand.vmem [shape: f32[2,1024], index: 2, kind: output, shape index: {}, may-alias: {0,2}]
  %s3 = sld [smem:[#allocation0]]
  $region18: #{threshold_dynamics.1} parent=0
    _
  %s5 = ssub.s32 1, %s3
  %s6 = scalar_select 0, %s5, %s3
  // Predicated region
  $region2: #{threshold_dynamics.1} parent=0 // pred_check
    _
  $region3: #{threshold_dynamics.1} parent=0 // pred_check_branch
    %8 = sbr.rel (0) target = $region5
  $region4: #{threshold_dynamics.1} parent=0 // pred_region
    _
  $region5: #{threshold_dynamics.1} parent=0 // pred_fallthru
    _
  // Predicated region
  $region6: #{threshold_dynamics.1} parent=0 // pred_check
    _
  $region7: #{threshold_dynamics.1} parent=0 // pred_check_branch
    %10 = sbr.rel (0) target = $region9
  $region8: #{threshold_dynamics.1} parent=0 // pred_region
    _
  $region9: #{threshold_dynamics.1} parent=0 // pred_fallthru
    _
  %v11 = vld [vmem:[%s0] sm:$0xff]
  %v12 = vld [vmem:[%s0 + $0x8] sm:$0xff]
  %v13 = vld [vmem:[%s1] sm:$0xff]
  %v14 = vld [vmem:[%s1 + $0x8] sm:$0xff]
  %v15 = vmul.f32 %v11, 0.9
  %v16 = vmul.f32 %v12, 0.9
  %v17 = vadd.f32 %v15, 0.02
  %v18 = vadd.f32 %v16, 0.02
  %v19 = vmul.f32 %v13, 0.05
  %v20 = vmul.f32 %v14, 0.05
  %v21 = vadd.f32 %v17, %v19
  %v22 = vadd.f32 %v18, %v20
  %23 = vst [vmem:[%s2] sm:$0xff] %v21
  %24 = vst [vmem:[%s2 + $0x8] sm:$0xff] %v22
  // Predicated region
  $region10: #{threshold_dynamics.1} parent=0 // pred_check
    _
  $region11: #{threshold_dynamics.1} parent=0 // pred_check_branch
    %26 = sbr.rel (0) target = $region13
  $region12: #{threshold_dynamics.1} parent=0 // pred_region
    _
  $region13: #{threshold_dynamics.1} parent=0 // pred_fallthru
    _
  // Predicated region
  $region14: #{threshold_dynamics.1} parent=0 // pred_check
    _
  $region15: #{threshold_dynamics.1} parent=0 // pred_check_branch
    %28 = sbr.rel (0) target = $region17
  $region16: #{threshold_dynamics.1} parent=0 // pred_region
    _
  $region17: #{threshold_dynamics.1} parent=0 // pred_fallthru
    _

</llo_original>
